<compile_context>
chip_gen: v7x
topology: tpu7x:2x2x1
jax: 0.10.0
libtpu: 0.0.40
codegen_flags: <defaults>
</compile_context>

<pallas_src>
import functools

import numpy as np
import jax
import jax.numpy as jnp
from jax.experimental import pallas as pl
from jax.experimental.pallas import tpu as pltpu


def _center_prior_kernel(pt_ref, gt_ref, mask_ref, out_ref):
    # pt_ref:   (3, TP)   rows = [px, py, 1/stride]                (per point)
    # gt_ref:   (G8, 8)   cols = [cx, cy, mx, my, -1/(2sx^2), -1/(2sy^2), 0, 0]
    # mask_ref: (G8, TP)  int8 inside-gt mask (gt-major / transposed)
    # out_ref:  (G8, TP)  f32 center-prior weights (gt-major / transposed)
    px = pt_ref[0:1, :]          # (1, TP)
    py = pt_ref[1:2, :]
    inv_s = pt_ref[2:3, :]

    cx = gt_ref[:, 0:1]          # (G8, 1)
    cy = gt_ref[:, 1:2]
    mx = gt_ref[:, 2:3]
    my = gt_ref[:, 3:4]
    neg_isx = gt_ref[:, 4:5]
    neg_isy = gt_ref[:, 5:6]

    dx = (px - cx) * inv_s - mx                              # (G8, TP)
    dy = (py - cy) * inv_s - my
    w = jnp.exp(dx * dx * neg_isx + dy * dy * neg_isy)       # one fused exp
    # center_prior_weights[~inside_gt_bbox_mask] = 0
    out_ref[...] = w * mask_ref[...].astype(jnp.float32)


def _round_up(x, m):
    return ((x + m - 1) // m) * m


def _cdiv(a, b):
    return -(-a // b)


def _select_lane_tile(num_points, g8, out_tile_bytes=1 << 20):
    """Lane tile: multiple of 128, output tile <= ~1 MiB, preferring an even
    step count >= 4 (two v7x TensorCores share the single parallel axis; >=4
    steps keeps the DMA pipeline ramp hidden on HBM-bound v5e)."""
    tp_cap = max(128, (out_tile_bytes // (4 * g8)) // 128 * 128)
    n = max(4, _cdiv(num_points, tp_cap))
    n += n % 2                                   # start from an even candidate
    first = None
    for cand in range(n, n + 17, 2):             # even candidates only
        tp = min(tp_cap, max(128, _round_up(_cdiv(num_points, cand), 128)))
        if first is None:
            first = tp
        steps = _cdiv(num_points, tp)
        if steps % 2 == 0:
            return tp
        if tp == 128:                            # can't shrink further
            break
    return first


@functools.partial(jax.jit,
                   static_argnames=("strides", "tp", "gt_major_output"))
def _center_prior_impl(anchor_points, gt_bboxes, labels, inside_gt_bbox_mask,
                       mean, sigma, *, strides, tp, gt_major_output):
    NP = sum(int(p.shape[0]) for p in anchor_points)
    NG = int(labels.shape[0])
    G8 = _round_up(NG, 8)

    if tp is None:
        tp = _select_lane_tile(NP, G8)
    else:
        tp = max(128, (int(tp) // 128) * 128)
    P_pad = _round_up(NP, tp)

    # --- packed per-point operand: (3, P_pad) = [px, py, 1/stride] ---
    points = jnp.concatenate(anchor_points, axis=0).astype(jnp.float32)
    inv_stride = jnp.concatenate([
        jnp.full((int(p.shape[0]),), 1.0 / float(s), jnp.float32)
        for p, s in zip(anchor_points, strides)])
    pt_data = jnp.stack([points[:, 0], points[:, 1], inv_stride], axis=0)
    pt_data = jnp.pad(pt_data, ((0, 0), (0, P_pad - NP)))

    # --- packed per-gt operand: (G8, 8) ---
    cx = (gt_bboxes[:, 0] + gt_bboxes[:, 2]) * 0.5
    cy = (gt_bboxes[:, 1] + gt_bboxes[:, 3]) * 0.5
    mx = mean[labels, 0]
    my = mean[labels, 1]
    sx = sigma[labels, 0]
    sy = sigma[labels, 1]
    neg_isx = -1.0 / (2.0 * sx * sx)
    neg_isy = -1.0 / (2.0 * sy * sy)
    gt_data = jnp.stack([cx, cy, mx, my, neg_isx, neg_isy], axis=1)
    gt_data = jnp.pad(gt_data.astype(jnp.float32), ((0, G8 - NG), (0, 2)))
    # NOTE: padded gt rows evaluate exp(0)=1 but are zeroed by the zero-padded
    # mask and sliced off below -- keep that invariant if the packing changes.

    # --- mask, gt-major, int8 (1 byte/elem keeps HBM bytes minimal on v5e) ---
    mask_t = jnp.pad(inside_gt_bbox_mask.T.astype(jnp.int8),
                     ((0, G8 - NG), (0, P_pad - NP)))

    # Explicit scoped-VMEM budget: double-buffered tiles + gt operand + slack.
    tile_bytes = 4 * G8 * tp + G8 * tp + 3 * 4 * tp
    vmem_limit = int(min(2 * tile_bytes + 2 * (G8 * 8 * 4) + (8 << 20),
                         64 << 20))

    cost = pl.CostEstimate(
        flops=13 * G8 * P_pad,
        transcendentals=G8 * P_pad,
        bytes_accessed=(5 * G8 + 12) * P_pad + G8 * 8 * 4)

    out = pl.pallas_call(
        _center_prior_kernel,
        out_shape=jax.ShapeDtypeStruct((G8, P_pad), jnp.float32),
        grid=(P_pad // tp,),
        in_specs=[pl.BlockSpec((3, tp), lambda i: (0, i)),
                  pl.BlockSpec((G8, 8), lambda i: (0, 0)),
                  pl.BlockSpec((G8, tp), lambda i: (0, i))],
        out_specs=pl.BlockSpec((G8, tp), lambda i: (0, i)),
        compiler_params=pltpu.CompilerParams(
            dimension_semantics=("parallel",),
            vmem_limit_bytes=vmem_limit),
        cost_estimate=cost,
    )(pt_data, gt_data, mask_t)

    w = out[:NG, :NP]                    # kernel-native gt-major (NG, NP)
    if not gt_major_output:
        w = w.T                          # module contract: (num_points, num_gt)
    return w


def center_prior_forward(anchor_points_list, gt_bboxes, labels,
                         inside_gt_bbox_mask, mean, sigma,
                         strides=(8, 16, 32, 64, 128), tp=None,
                         gt_major_output=False):
    """Pallas implementation of CenterPrior.forward (force_topk=False).

    Set gt_major_output=True to receive (num_gt, num_points) and skip the
    point-major transpose (a full extra HBM pass) when the consumer can take
    the kernel-native layout.
    """
    num_gts = int(labels.shape[0])
    num_points = sum(int(p.shape[0]) for p in anchor_points_list)
    if num_gts == 0:
        shape = (num_gts, num_points) if gt_major_output else (num_points,
                                                               num_gts)
        return jnp.zeros(shape, jnp.float32), inside_gt_bbox_mask

    w = _center_prior_impl(tuple(anchor_points_list), gt_bboxes, labels,
                           inside_gt_bbox_mask, mean, sigma,
                           strides=tuple(int(s) for s in strides),
                           tp=tp, gt_major_output=bool(gt_major_output))
    # TODO(synk): force_topk branch (topk over gts with no inside points +
    # scatter into inside_gt_bbox_mask) is not implemented; module default
    # force_topk=False, so the mask is returned unchanged.
    return w, inside_gt_bbox_mask


def center_prior_reference(anchor_points_list, gt_bboxes, labels,
                           inside_gt_bbox_mask, mean, sigma,
                           strides=(8, 16, 32, 64, 128)):
    """Pure-JAX reference mirroring the PyTorch code."""
    cx = (gt_bboxes[:, 0] + gt_bboxes[:, 2]) * 0.5
    cy = (gt_bboxes[:, 1] + gt_bboxes[:, 3]) * 0.5
    gt_center = jnp.stack([cx, cy], axis=1)[None]            # (1, G, 2)
    inst_mean = mean[labels][None]                            # (1, G, 2)
    inst_sigma = sigma[labels][None]                          # (1, G, 2)
    lvl_out = []
    for pts, s in zip(anchor_points_list, strides):
        pts_e = pts[:, None, :]                               # (P, 1, 2)
        dist = ((pts_e - gt_center) / float(s) - inst_mean) ** 2
        prior = jnp.prod(jnp.exp(-dist / (2.0 * inst_sigma ** 2)), axis=-1)
        lvl_out.append(prior)
    w = jnp.concatenate(lvl_out, axis=0)
    w = jnp.where(inside_gt_bbox_mask, w, 0.0)
    return w, inside_gt_bbox_mask


if __name__ == "__main__":
    key = jax.random.PRNGKey(0)
    num_classes = 80
    strides = (8, 16, 32, 64, 128)
    feat_sizes = [(16, 16), (8, 8), (4, 4), (2, 2), (1, 1)]  # 341 points total
    num_gt = 8

    # Anchor points per level (standard point generator: (idx + 0.5) * stride)
    anchor_points_list = []
    for (h, w), s in zip(feat_sizes, strides):
        ys, xs = jnp.meshgrid(jnp.arange(h, dtype=jnp.float32),
                              jnp.arange(w, dtype=jnp.float32), indexing="ij")
        pts = jnp.stack([(xs.reshape(-1) + 0.5) * s,
                         (ys.reshape(-1) + 0.5) * s], axis=-1)
        anchor_points_list.append(pts)

    # Deterministic synthetic gt boxes / labels
    k1, k2, k3, k4, k5 = jax.random.split(key, 5)
    xy1 = jax.random.uniform(k1, (num_gt, 2), minval=0.0, maxval=96.0)
    wh = jax.random.uniform(k2, (num_gt, 2), minval=8.0, maxval=32.0)
    gt_bboxes = jnp.concatenate([xy1, xy1 + wh], axis=-1).astype(jnp.float32)
    labels = jax.random.randint(k3, (num_gt,), 0, num_classes)

    # inside_gt_bbox_mask: point center within gt box
    all_pts = jnp.concatenate(anchor_points_list, axis=0)   # (NP, 2)
    px = all_pts[:, 0:1]
    py = all_pts[:, 1:2]
    inside_gt_bbox_mask = ((px >= gt_bboxes[:, 0][None]) &
                           (py >= gt_bboxes[:, 1][None]) &
                           (px <= gt_bboxes[:, 2][None]) &
                           (py <= gt_bboxes[:, 3][None]))

    # Module parameters: nn.Parameter(zeros(num_classes,2)) / ones(num_classes,2),
    # perturbed deterministically so the label-gather actually matters.
    mean = jnp.zeros((num_classes, 2), jnp.float32) + \
        0.1 * jax.random.normal(k4, (num_classes, 2), jnp.float32)
    sigma = jnp.ones((num_classes, 2), jnp.float32) + \
        0.2 * jax.random.uniform(k5, (num_classes, 2), jnp.float32)

    # Pallas kernel (default module-contract layout)
    w_pallas, mask_out = center_prior_forward(
        anchor_points_list, gt_bboxes, labels, inside_gt_bbox_mask,
        mean, sigma, strides)
    w_pallas = jax.block_until_ready(w_pallas)

    # Pallas kernel (gt-major layout, skips the transpose pass)
    w_gt_major, _ = center_prior_forward(
        anchor_points_list, gt_bboxes, labels, inside_gt_bbox_mask,
        mean, sigma, strides, gt_major_output=True)
    w_gt_major = jax.block_until_ready(w_gt_major)

    # Pure-JAX reference
    w_ref, _ = center_prior_reference(
        anchor_points_list, gt_bboxes, labels, inside_gt_bbox_mask,
        mean, sigma, strides)

    assert w_pallas.shape == (int(all_pts.shape[0]), num_gt)
    np.testing.assert_allclose(np.asarray(w_pallas), np.asarray(w_ref),
                               rtol=2e-5, atol=1e-6)
    np.testing.assert_allclose(np.asarray(w_gt_major), np.asarray(w_ref).T,
                               rtol=2e-5, atol=1e-6)
    np.testing.assert_array_equal(np.asarray(mask_out),
                                  np.asarray(inside_gt_bbox_mask))
    print("KERNEL_OK")
</pallas_src>

<mosaic_0001>
module attributes {stable_mosaic.version = 11 : i64} {
  func.func @_center_prior_kernel(%arg0: i32, %arg1: memref<3x128xf32, #tpu.memory_space<vmem>>, %arg2: memref<8x8xf32, #tpu.memory_space<vmem>>, %arg3: memref<8x128xi8, #tpu.memory_space<vmem>>, %arg4: memref<8x128xf32, #tpu.memory_space<vmem>>) attributes {dimension_semantics = [#tpu.dimension_semantics<parallel>], iteration_bounds = array<i64: 3>, scalar_prefetch = 0 : i64, scratch_operands = 0 : i64, tpu.core_type = #tpu.core_type<tc>, window_params = [{transform_indices = @transform_0, window_bounds = array<i64: 3, 128>}, {pipeline_mode = #tpu.pipeline_mode<synchronous>, transform_indices = @transform_1, window_bounds = array<i64: 8, 8>}, {transform_indices = @transform_2, window_bounds = array<i64: 8, 128>}, {transform_indices = @transform_3, window_bounds = array<i64: 8, 128>}]} {
    %c0 = arith.constant 0 : index
    %c0_0 = arith.constant 0 : index
    %0 = vector.load %arg1[%c0, %c0_0] : memref<3x128xf32, #tpu.memory_space<vmem>>, vector<1x128xf32>
    %c1 = arith.constant 1 : index
    %c0_1 = arith.constant 0 : index
    %1 = vector.load %arg1[%c1, %c0_1] : memref<3x128xf32, #tpu.memory_space<vmem>>, vector<1x128xf32>
    %c2 = arith.constant 2 : index
    %c0_2 = arith.constant 0 : index
    %2 = vector.load %arg1[%c2, %c0_2] : memref<3x128xf32, #tpu.memory_space<vmem>>, vector<1x128xf32>
    %c0_3 = arith.constant 0 : index
    %c0_4 = arith.constant 0 : index
    %3 = vector.load %arg2[%c0_3, %c0_4] : memref<8x8xf32, #tpu.memory_space<vmem>>, vector<8x1xf32>
    %c0_5 = arith.constant 0 : index
    %c1_6 = arith.constant 1 : index
    %4 = vector.load %arg2[%c0_5, %c1_6] : memref<8x8xf32, #tpu.memory_space<vmem>>, vector<8x1xf32>
    %c0_7 = arith.constant 0 : index
    %c2_8 = arith.constant 2 : index
    %5 = vector.load %arg2[%c0_7, %c2_8] : memref<8x8xf32, #tpu.memory_space<vmem>>, vector<8x1xf32>
    %c0_9 = arith.constant 0 : index
    %c3 = arith.constant 3 : index
    %6 = vector.load %arg2[%c0_9, %c3] : memref<8x8xf32, #tpu.memory_space<vmem>>, vector<8x1xf32>
    %c0_10 = arith.constant 0 : index
    %c4 = arith.constant 4 : index
    %7 = vector.load %arg2[%c0_10, %c4] : memref<8x8xf32, #tpu.memory_space<vmem>>, vector<8x1xf32>
    %c0_11 = arith.constant 0 : index
    %c5 = arith.constant 5 : index
    %8 = vector.load %arg2[%c0_11, %c5] : memref<8x8xf32, #tpu.memory_space<vmem>>, vector<8x1xf32>
    %9 = vector.broadcast %0 : vector<1x128xf32> to vector<8x128xf32>
    %10 = vector.broadcast %3 : vector<8x1xf32> to vector<8x128xf32>
    %11 = arith.subf %9, %10 : vector<8x128xf32>
    %12 = vector.broadcast %2 : vector<1x128xf32> to vector<8x128xf32>
    %13 = arith.mulf %11, %12 : vector<8x128xf32>
    %14 = vector.broadcast %5 : vector<8x1xf32> to vector<8x128xf32>
    %15 = arith.subf %13, %14 : vector<8x128xf32>
    %16 = vector.broadcast %1 : vector<1x128xf32> to vector<8x128xf32>
    %17 = vector.broadcast %4 : vector<8x1xf32> to vector<8x128xf32>
    %18 = arith.subf %16, %17 : vector<8x128xf32>
    %19 = vector.broadcast %2 : vector<1x128xf32> to vector<8x128xf32>
    %20 = arith.mulf %18, %19 : vector<8x128xf32>
    %21 = vector.broadcast %6 : vector<8x1xf32> to vector<8x128xf32>
    %22 = arith.subf %20, %21 : vector<8x128xf32>
    %23 = arith.mulf %15, %15 : vector<8x128xf32>
    %24 = vector.broadcast %7 : vector<8x1xf32> to vector<8x128xf32>
    %25 = arith.mulf %23, %24 : vector<8x128xf32>
    %26 = arith.mulf %22, %22 : vector<8x128xf32>
    %27 = vector.broadcast %8 : vector<8x1xf32> to vector<8x128xf32>
    %28 = arith.mulf %26, %27 : vector<8x128xf32>
    %29 = arith.addf %25, %28 : vector<8x128xf32>
    %30 = math.exp %29 : vector<8x128xf32>
    %c0_12 = arith.constant 0 : index
    %c0_13 = arith.constant 0 : index
    %31 = vector.load %arg3[%c0_12, %c0_13] : memref<8x128xi8, #tpu.memory_space<vmem>>, vector<8x128xi8>
    %32 = arith.sitofp %31 : vector<8x128xi8> to vector<8x128xf32>
    %33 = arith.mulf %30, %32 : vector<8x128xf32>
    %c0_14 = arith.constant 0 : index
    %c0_15 = arith.constant 0 : index
    %34 = vector.load %arg4[%c0_14, %c0_15] : memref<8x128xf32, #tpu.memory_space<vmem>>, vector<8x128xf32>
    tpu.vector_store %arg4[%c0_14, %c0_15], %33 {strides = array<i32>} : memref<8x128xf32, #tpu.memory_space<vmem>>, vector<8x128xf32>,
    return
  }
  func.func @transform_0(%arg0: i32) -> (i32, i32) {
    %c0_i32 = arith.constant 0 : i32
    %c0_i32_0 = arith.constant 0 : i32
    return %c0_i32, %arg0 : i32, i32
  }
  func.func @transform_1(%arg0: i32) -> (i32, i32) {
    %c0_i32 = arith.constant 0 : i32
    %c0_i32_0 = arith.constant 0 : i32
    %c0_i32_1 = arith.constant 0 : i32
    return %c0_i32, %c0_i32_0 : i32, i32
  }
  func.func @transform_2(%arg0: i32) -> (i32, i32) {
    %c0_i32 = arith.constant 0 : i32
    %c0_i32_0 = arith.constant 0 : i32
    return %c0_i32, %arg0 : i32, i32
  }
  func.func @transform_3(%arg0: i32) -> (i32, i32) {
    %c0_i32 = arith.constant 0 : i32
    %c0_i32_0 = arith.constant 0 : i32
    return %c0_i32, %arg0 : i32, i32
  }
}

</mosaic_0001>

<llo_original>
// kernel: _center_prior_impl.1
$region0: #{_center_prior_impl.1}
  #allocation0 [shape = 'u32[]', space=smem, size = 0x4, offset = 0x4, fixed_abs, tag = 'smem constant byte address 0x4 - core index']
  #allocation1 [shape = 'u32[144,128]{1,0:T(1,128)}', space=vmem, size = 0x12000, scoped, tag = 'internal scratch']
  %s0 = inlined_call_operand.vmem [shape: f32[3,384], index: 0, kind: input, shape index: {}]
  %s1 = inlined_call_operand.vmem [shape: f32[8,8], index: 1, kind: input, shape index: {}]
  %s2 = inlined_call_operand.vmem [shape: s8[8,384], index: 2, kind: input, shape index: {}]
  %s3 = inlined_call_operand.vmem [shape: f32[8,384], index: 3, kind: output, shape index: {}]
  %s4 = sld [smem:[#allocation0]]
  $region45: #{_center_prior_impl.1} parent=0
    _
  %s6 = ssub.s32 1, %s4
  %s7 = scalar_select 0, %s6, %s4
  loop: start=0, step=1, limit=5
  $region2: #{_center_prior_impl.1} parent=0 // loop_pre_header
    _
  $region3: #{_center_prior_impl.1} parent=0 // loop_header
    %s9 = sphi 0, %s13
    %p10 = scmp.ge.s32.totalorder %s9, 5
    %s19 = sphi 0, %s21
    %s22 = sphi 0, %s19
    %s23 = sphi 0, %s22
    %s39 = sphi 0, %s23
    %s43 = sphi 0, %s43
    %s45 = sphi 0, %s43
    %s46 = sphi 0, %s45
    %s60 = sphi 0, %s46
    %s66 = sphi 0, %s68
    %s69 = sphi 0, %s66
    %s70 = sphi 0, %s69
    %s86 = sphi 0, %s70
    %s92 = sphi 0, %s94
    %s95 = sphi 0, %s92
    %s96 = sphi 0, %s95
    %s112 = sphi 0, %s96
  $region4: #{_center_prior_impl.1} parent=0 // loop_header_branch
    %12 = sbr.rel (%p10) target = $region8
  $region5: #{_center_prior_impl.1} parent=0 // loop_body
    %s14 = ssub.s32 %s9, 1
    %s15 = ssub.s32 %s9, 2
    %s16 = sadd.s32 %s9, 1
    %s17 = ssub.s32 %s9, %s16
    %p18 = scmp.eq.s32.totalorder %s17, 0
    %s20 = sadd.s32 %s19, 1
    %s21 = scalar_select %p18, %s19, %s20
    %p24 = pneg %p18
    %p25 = scmp.eq.s32.totalorder %s9, 2
    %p26 = por %p24, %p25
    %p27 = scmp.ne.s32.totalorder %s19, %s22
    %p28 = scmp.eq.s32.totalorder %s9, 0
    %p29 = por %p27, %p28
    %p30 = scmp.ne.s32.totalorder %s19, %s22
    %p31 = scmp.eq.s32.totalorder %s14, 2
    %p32 = por %p30, %p31
    %p33 = scmp.ne.s32.totalorder %s22, %s23
    %p34 = scmp.eq.s32.totalorder %s14, 0
    %p35 = por %p33, %p34
    %p36 = scmp.ne.s32.totalorder %s22, %s23
    %p37 = scmp.eq.s32.totalorder %s15, 2
    %p38 = por %p36, %p37
    %p40 = scmp.ne.s32.totalorder %s23, %s39
    %p41 = scmp.eq.s32.totalorder %s15, 0
    %p42 = por %p40, %p41
    %s44 = sadd.s32 %s43, 1
    %p47 = scmp.eq.s32.totalorder %s9, 2
    %p48 = scmp.ne.s32.totalorder %s43, %s45
    %p49 = scmp.eq.s32.totalorder %s9, 0
    %p50 = por %p48, %p49
    %p51 = scmp.ne.s32.totalorder %s43, %s45
    %p52 = scmp.eq.s32.totalorder %s14, 2
    %p53 = por %p51, %p52
    %p54 = scmp.ne.s32.totalorder %s45, %s46
    %p55 = scmp.eq.s32.totalorder %s14, 0
    %p56 = por %p54, %p55
    %p57 = scmp.ne.s32.totalorder %s45, %s46
    %p58 = scmp.eq.s32.totalorder %s15, 2
    %p59 = por %p57, %p58
    %p61 = scmp.ne.s32.totalorder %s46, %s60
    %p62 = scmp.eq.s32.totalorder %s15, 0
    %p63 = por %p61, %p62
    %s64 = ssub.s32 %s9, %s16
    %p65 = scmp.eq.s32.totalorder %s64, 0
    %s67 = sadd.s32 %s66, 1
    %s68 = scalar_select %p65, %s66, %s67
    %p71 = pneg %p65
    %p72 = scmp.eq.s32.totalorder %s9, 2
    %p73 = por %p71, %p72
    %p74 = scmp.ne.s32.totalorder %s66, %s69
    %p75 = scmp.eq.s32.totalorder %s9, 0
    %p76 = por %p74, %p75
    %p77 = scmp.ne.s32.totalorder %s66, %s69
    %p78 = scmp.eq.s32.totalorder %s14, 2
    %p79 = por %p77, %p78
    %p80 = scmp.ne.s32.totalorder %s69, %s70
    %p81 = scmp.eq.s32.totalorder %s14, 0
    %p82 = por %p80, %p81
    %p83 = scmp.ne.s32.totalorder %s69, %s70
    %p84 = scmp.eq.s32.totalorder %s15, 2
    %p85 = por %p83, %p84
    %p87 = scmp.ne.s32.totalorder %s70, %s86
    %p88 = scmp.eq.s32.totalorder %s15, 0
    %p89 = por %p87, %p88
    %s90 = ssub.s32 %s9, %s16
    %p91 = scmp.eq.s32.totalorder %s90, 0
    %s93 = sadd.s32 %s92, 1
    %s94 = scalar_select %p91, %s92, %s93
    %p97 = pneg %p91
    %p98 = scmp.eq.s32.totalorder %s9, 2
    %p99 = por %p97, %p98
    %p100 = scmp.ne.s32.totalorder %s92, %s95
    %p101 = scmp.eq.s32.totalorder %s9, 0
    %p102 = por %p100, %p101
    %p103 = scmp.ne.s32.totalorder %s92, %s95
    %p104 = scmp.eq.s32.totalorder %s14, 2
    %p105 = por %p103, %p104
    %p106 = scmp.ne.s32.totalorder %s95, %s96
    %p107 = scmp.eq.s32.totalorder %s14, 0
    %p108 = por %p106, %p107
    %p109 = scmp.ne.s32.totalorder %s95, %s96
    %p110 = scmp.eq.s32.totalorder %s15, 2
    %p111 = por %p109, %p110
    %p113 = scmp.ne.s32.totalorder %s96, %s112
    %p114 = scmp.eq.s32.totalorder %s15, 0
    %p115 = por %p113, %p114
    %p116 = scmp.le.s32.totalorder 1, %s9
    %p117 = scmp.lt.s32.totalorder %s9, 4
    %p118 = pnand %p116, %p117
    %p119 = pneg %p118
    // Predicated region
    $region9: #{_center_prior_impl.1} parent=5 // pred_check
      _
    $region10: #{_center_prior_impl.1} parent=5 // pred_check_branch
      %121 = sbr.rel (%p118) target = $region12
    $region11: #{_center_prior_impl.1} parent=5 // pred_region
      %s122 = ssub.s32 %s9, 1
      // Predicated region
      $region13: #{_center_prior_impl.1} parent=11 // pred_check
        %p123 = pneg %p56
      $region14: #{_center_prior_impl.1} parent=11 // pred_check_branch
        %125 = sbr.rel (%p123) target = $region16
      $region15: #{_center_prior_impl.1} parent=11 // pred_region
        _
      $region16: #{_center_prior_impl.1} parent=11 // pred_fallthru
        _
    $region12: #{_center_prior_impl.1} parent=5 // pred_fallthru
      _
    %p126 = scmp.lt.s32.totalorder %s9, 3
    // Predicated region
    $region17: #{_center_prior_impl.1} parent=5 // pred_check
      %p127 = pneg %p126
    $region18: #{_center_prior_impl.1} parent=5 // pred_check_branch
      %129 = sbr.rel (%p127) target = $region20
    $region19: #{_center_prior_impl.1} parent=5 // pred_region
      // Predicated region
      $region21: #{_center_prior_impl.1} parent=19 // pred_check
        %p130 = pneg %p29
      $region22: #{_center_prior_impl.1} parent=19 // pred_check_branch
        %132 = sbr.rel (%p130) target = $region24
      $region23: #{_center_prior_impl.1} parent=19 // pred_region
        %p133 = scmp.lt.s32.totalorder %s9, 2
        %s134 = scalar_select %p133, %s9, 2
        %s135 = smul.addr %s134, 4
        %s136 = scalar_lea.vmem %s0, %s135
      $region24: #{_center_prior_impl.1} parent=19 // pred_fallthru
        _
      // Predicated region
      $region25: #{_center_prior_impl.1} parent=19 // pred_check
        %p137 = pneg %p76
      $region26: #{_center_prior_impl.1} parent=19 // pred_check_branch
        %139 = sbr.rel (%p137) target = $region28
      $region27: #{_center_prior_impl.1} parent=19 // pred_region
        %p140 = scmp.lt.s32.totalorder %s9, 2
        %s141 = scalar_select %p140, %s9, 2
        %s142 = smul.addr %s141, 2
        %s143 = scalar_lea.vmem %s2, %s142
      $region28: #{_center_prior_impl.1} parent=19 // pred_fallthru
        _
    $region20: #{_center_prior_impl.1} parent=5 // pred_fallthru
      _
    %p144 = scmp.le.s32.totalorder 1, %s9
    %p145 = scmp.lt.s32.totalorder %s9, 4
    %p146 = pnand %p144, %p145
    %p147 = pneg %p146
    // Predicated region
    $region29: #{_center_prior_impl.1} parent=5 // pred_check
      _
    $region30: #{_center_prior_impl.1} parent=5 // pred_check_branch
      %149 = sbr.rel (%p146) target = $region32
    $region31: #{_center_prior_impl.1} parent=5 // pred_region
      %s150 = ssub.s32 %s9, 1
      %p151 = scmp.lt.s32.totalorder %s14, 2
      %s152 = scalar_select %p151, %s14, 2
      %s153 = smul.addr %s152, 4
      %s154 = scalar_lea.vmem %s0, %s153
      %p155 = pneg %p35
      %p156 = pneg %p32
      %p157 = pneg %p56
      %p158 = pneg %p53
      %p159 = scmp.lt.s32.totalorder %s14, 2
      %s160 = scalar_select %p159, %s14, 2
      %s161 = smul.addr %s160, 2
      %s162 = scalar_lea.vmem %s2, %s161
      %p163 = pneg %p82
      %p164 = pneg %p79
      %p165 = pneg %p108
      %p166 = pneg %p105
      %p167 = scmp.lt.s32.totalorder %s14, 2
      %s168 = scalar_select %p167, %s14, 2
      %s169 = smul.addr %s168, 8
      %s170 = scalar_lea.vmem %s3, %s169
      %p171 = scmp.lt.s32.totalorder %s14, 2
      %s172 = scalar_select %p171, %s14, 2
      %s173 = smul.addr %s172, 4
      %s174 = scalar_lea.vmem %s0, %s173
      %p175 = scmp.lt.s32.totalorder %s14, 2
      %s176 = scalar_select %p175, %s14, 2
      %s177 = smul.addr %s176, 2
      %s178 = scalar_lea.vmem %s2, %s177
      %p179 = scmp.lt.s32.totalorder %s14, 2
      %s180 = scalar_select %p179, %s14, 2
      %s181 = smul.addr %s180, 8
      %s182 = scalar_lea.vmem %s3, %s181
      %v183 = vld [vmem:[%s174] sm:$0x1]
      %v184 = vld [vmem:[%s174 + $0x1] sm:$0x1]
      %v185 = vld [vmem:[%s174 + $0x2] sm:$0x1]
      %v186 = vld [vmem:[%s1] sm:$0xff]
      %v187 = vlaneseq
      %v188 = vshrl.u32 %v187, 7
      %v189 = vsub.s32 0, %v188
      %v190 = vrot.slane %v183, %v189
      %192 = vset.pattern.permute.xlu0 0
      %193 = vperm.xlu0 %192, %v186
      %v194 = vpop.permute.xlu0 %193
      %v196 = vsub.f32 %v190, %v194
      %v197 = vlaneseq
      %v198 = vshrl.u32 %v197, 7
      %v199 = vsub.s32 0, %v198
      %v200 = vrot.slane %v185, %v199
      %v201 = vmul.f32 %v196, %v200
      %202 = vset.pattern.permute.xlu0 2
      %203 = vperm.xlu0 %202, %v186
      %v204 = vpop.permute.xlu0 %203
      %v206 = vsub.f32 %v201, %v204
      %v207 = vlaneseq
      %v208 = vshrl.u32 %v207, 7
      %v209 = vsub.s32 0, %v208
      %v210 = vrot.slane %v184, %v209
      %211 = vset.pattern.permute.xlu0 1
      %212 = vperm.xlu0 %211, %v186
      %v213 = vpop.permute.xlu0 %212
      %v215 = vsub.f32 %v210, %v213
      %v216 = vmul.f32 %v215, %v200
      %217 = vset.pattern.permute.xlu0 3
      %218 = vperm.xlu0 %217, %v186
      %v219 = vpop.permute.xlu0 %218
      %v221 = vsub.f32 %v216, %v219
      %v222 = vmul.f32 %v206, %v206
      %223 = vset.pattern.permute.xlu0 4
      %224 = vperm.xlu0 %223, %v186
      %v225 = vpop.permute.xlu0 %224
      %v227 = vmul.f32 %v222, %v225
      %v228 = vmul.f32 %v221, %v221
      %229 = vset.pattern.permute.xlu0 5
      %230 = vperm.xlu0 %229, %v186
      %v231 = vpop.permute.xlu0 %230
      %v233 = vmul.f32 %v228, %v231
      %v234 = vadd.f32 %v227, %v233
      %v235 = vmul.f32 %v234, 1.442695
      %v236 = vpow.pop %v235
      %v237 = vld [vmem:[%s178] sm:$0x3]
      %v238 = vunpack.c.0.s8 %v237
      %v239 = vcvt.s32.f32 %v238
      %v240 = vmul.f32 %v236, %v239
      %241 = vst [vmem:[%s182] sm:$0xff] %v240
      %p242 = scmp.lt.s32.totalorder %s14, 2
      %s243 = scalar_select %p242, %s14, 2
      %s244 = smul.addr %s243, 8
      %s245 = scalar_lea.vmem %s3, %s244
      // Predicated region
      $region33: #{_center_prior_impl.1} parent=31 // pred_check
        %p246 = pneg %p105
      $region34: #{_center_prior_impl.1} parent=31 // pred_check_branch
        %248 = sbr.rel (%p246) target = $region36
      $region35: #{_center_prior_impl.1} parent=31 // pred_region
        _
      $region36: #{_center_prior_impl.1} parent=31 // pred_fallthru
        _
    $region32: #{_center_prior_impl.1} parent=5 // pred_fallthru
      _
    %p249 = scmp.le.s32.totalorder 2, %s9
    // Predicated region
    $region37: #{_center_prior_impl.1} parent=5 // pred_check
      %p250 = pneg %p249
    $region38: #{_center_prior_impl.1} parent=5 // pred_check_branch
      %252 = sbr.rel (%p250) target = $region40
    $region39: #{_center_prior_impl.1} parent=5 // pred_region
      %s253 = ssub.s32 %s9, 2
      // Predicated region
      $region41: #{_center_prior_impl.1} parent=39 // pred_check
        %p254 = pneg %p111
      $region42: #{_center_prior_impl.1} parent=39 // pred_check_branch
        %256 = sbr.rel (%p254) target = $region44
      $region43: #{_center_prior_impl.1} parent=39 // pred_region
        %p257 = scmp.lt.s32.totalorder %s15, 2
        %s258 = scalar_select %p257, %s15, 2
        %s259 = smul.addr %s258, 8
        %s260 = scalar_lea.vmem %s3, %s259
      $region44: #{_center_prior_impl.1} parent=39 // pred_fallthru
        _
    $region40: #{_center_prior_impl.1} parent=5 // pred_fallthru
      _
  $region6: #{_center_prior_impl.1} parent=0 // loop_footer
    %s13 = sadd.s32 1, %s9
  $region7: #{_center_prior_impl.1} parent=0 // loop_footer_branch
    %8 = sbr.rel target = $region3
  $region8: #{_center_prior_impl.1} parent=0 // loop_exit
    _

</llo_original>
